<compile_context>
chip_gen: v7x
topology: tpu7x:2x2x1
jax: 0.10.0
libtpu: 0.0.40
codegen_flags: <defaults>
</compile_context>

<pallas_src>
import math

import jax
import jax.numpy as jnp
from jax.experimental import pallas as pl
from jax.experimental.pallas import tpu as pltpu

_GROUP = 5                      # (cx, cy, w, h, theta)
_LANE_QUANTUM = 640             # lcm(5, 128): box groups never straddle a row
_RAD2DEG = 180.0 / math.pi
_LOG2E = 1.4426950408889634


def _bbox_transform_kernel(std_ref, mean_ref, size_m_ref, theta_m_ref,
                           boxes_ref, deltas_ref, out_ref):
    """One (tile_rows, lanes) f32 block.

    std/mean already carry log2(e) on the w/h channels and 180/pi on the theta
    channel, so per lane:
      channels 0,1 : out = b + d * wh      (wh fetched via a -2 lane rotate)
      channel  4   : out = b + d * 1
      channels 2,3 : out = exp2(d) * b
    """
    b = boxes_ref[...]                                    # full-tile load
    shape = b.shape
    d = (deltas_ref[...] * jnp.broadcast_to(std_ref[...], shape)
         + jnp.broadcast_to(mean_ref[...], shape))

    # wh[r, i] = b[r, (i + 2) % lanes]: w lands on the cx lane, h on the cy
    # lane.  Safe only because lanes % 5 == 0 (groups stay inside a row), so
    # the wrap at the row end touches channel-2/3/4 lanes only, and those never
    # consume `wh` (theta lanes get 1.0 below, size lanes take the exp2 path).
    lanes = shape[-1]
    wh = pltpu.roll(b, shift=lanes - 2, axis=1)           # XLU, not VPU

    is_theta = jnp.broadcast_to(theta_m_ref[...], shape) != 0.0
    is_size = jnp.broadcast_to(size_m_ref[...], shape) != 0.0

    whm = jnp.where(is_theta, 1.0, wh)    # 1 on theta lanes, w/h on ctr lanes
    linear = b + d * whm                  # valid on channels 0, 1, 4
    size = jnp.exp2(d) * b                # valid on channels 2, 3 (EUP)

    # Keep this a true *select*: exp2(d) may overflow to inf on non-size lanes
    # and must never be blended arithmetically.  Single unmasked store.
    out_ref[...] = jnp.where(is_size, size, linear)


def _bbox_transform_jax(boxes, deltas, mean, std):
    """Pure-JAX formula (reference + small-input fast path)."""
    widths, heights = boxes[:, :, 2], boxes[:, :, 3]
    ctr_x, ctr_y, theta = boxes[:, :, 0], boxes[:, :, 1], boxes[:, :, 4]
    dx = deltas[:, :, 0] * std[0] + mean[0]
    dy = deltas[:, :, 1] * std[1] + mean[1]
    dw = deltas[:, :, 2] * std[2] + mean[2]
    dh = deltas[:, :, 3] * std[3] + mean[3]
    dtheta = deltas[:, :, 4] * std[4] + mean[4]
    pred_ctr_x = ctr_x + dx * widths
    pred_ctr_y = ctr_y + dy * heights
    pred_w = jnp.exp(dw) * widths
    pred_h = jnp.exp(dh) * heights
    pred_theta = theta + dtheta * _RAD2DEG
    return jnp.stack([pred_ctr_x, pred_ctr_y, pred_w, pred_h, pred_theta], axis=2)


bbox_transform_ref = _bbox_transform_jax


def _choose_tile_rows(rows, lanes, block_bytes, min_grid):
    """Sublane-aligned row block: big enough for the HBM roofline plateau,
    small enough for every generation's default scoped VMEM (3 streams x 2
    buffers), shrunk until the grid has >= min_grid steps so v7x's second
    TensorCore and the DMA pipeline have work to overlap."""
    if rows < 8:
        return rows                               # full (tiny) row count
    cap = max(8, (block_bytes // (lanes * 4)) // 8 * 8)
    tr = max(8, min(cap, (rows // 8) * 8))
    while tr > 8 and pl.cdiv(rows, tr) < min_grid:
        tr = max(8, ((tr // 2) // 8) * 8)
    return tr


def bbox_transform(boxes, deltas, mean=None, std=None, *,
                   lanes=_LANE_QUANTUM, block_bytes=2 * 1024 * 1024,
                   min_grid=4, min_pallas_elems=262144):
    """boxes, deltas: (B, N, 5) -> pred_boxes (B, N, 5) float32."""
    if mean is None:
        mean = jnp.zeros((_GROUP,), jnp.float32)
    if std is None:
        std = jnp.array([0.1, 0.1, 0.2, 0.2, 0.1], jnp.float32)
    mean = jnp.asarray(mean, jnp.float32)
    std = jnp.asarray(std, jnp.float32)

    B, N, C = boxes.shape
    assert C == _GROUP and deltas.shape == boxes.shape
    assert lanes % _LANE_QUANTUM == 0, "lanes must be a multiple of 640"

    boxes = boxes.astype(jnp.float32)
    deltas = deltas.astype(jnp.float32)
    total = B * N * _GROUP

    # Tiny inputs: per-grid-step overhead plus any layout glue dominates; let
    # XLA fuse the plain formula instead.
    if total < min_pallas_elems:
        return _bbox_transform_jax(boxes, deltas, mean, std)

    flat_b = boxes.reshape(-1)                     # free reshape (row-major)
    flat_d = deltas.reshape(-1)
    aligned = (total % lanes == 0)
    rows = total // lanes if aligned else pl.cdiv(total, lanes)
    if not aligned:
        # TODO(synk): a fully copy-free ragged path needs in-kernel manual DMA
        # over 1-D HBM refs (or a planar relayout); here we only pad to the
        # next multiple of `lanes` (< 640 elements) and slice the output back.
        pad = rows * lanes - total
        flat_b = jnp.pad(flat_b, (0, pad))
        flat_d = jnp.pad(flat_d, (0, pad))
    xb = flat_b.reshape(rows, lanes)
    xd = flat_d.reshape(rows, lanes)

    tr = _choose_tile_rows(rows, lanes, block_bytes, min_grid)
    grid = (pl.cdiv(rows, tr),)        # uneven last block: OOB stores dropped

    # Tiny resident per-lane maps (period 5), fetched once (index_map pinned).
    # Constant folding: exp -> exp2 via log2(e) on w/h lanes, 180/pi on theta.
    reps = lanes // _GROUP
    fold = jnp.array([1.0, 1.0, _LOG2E, _LOG2E, _RAD2DEG], jnp.float32)
    std_lane = jnp.tile(std * fold, reps)[None, :]
    mean_lane = jnp.tile(mean * fold, reps)[None, :]
    size_mask = jnp.tile(jnp.array([0, 0, 1, 1, 0], jnp.float32), reps)[None, :]
    theta_mask = jnp.tile(jnp.array([0, 0, 0, 0, 1], jnp.float32), reps)[None, :]

    map_spec = pl.BlockSpec((1, lanes), lambda r: (0, 0))
    stream_spec = pl.BlockSpec((tr, lanes), lambda r: (r, 0))

    out = pl.pallas_call(
        _bbox_transform_kernel,
        out_shape=jax.ShapeDtypeStruct((rows, lanes), jnp.float32),
        grid=grid,
        in_specs=[map_spec, map_spec, map_spec, map_spec,
                  stream_spec, stream_spec],
        out_specs=stream_spec,
        compiler_params=pltpu.CompilerParams(
            dimension_semantics=("parallel",),
            vmem_limit_bytes=32 * 1024 * 1024),
    )(std_lane, mean_lane, size_mask, theta_mask, xb, xd)

    if aligned:
        return out.reshape(B, N, _GROUP)
    return out.reshape(-1)[:total].reshape(B, N, _GROUP)


if __name__ == "__main__":
    # Fixed module "parameters" (mean / std), as in BBoxTransform.__init__.
    mean = jnp.array([0.0, 0.0, 0.0, 0.0, 0.0], dtype=jnp.float32)
    std = jnp.array([0.1, 0.1, 0.2, 0.2, 0.1], dtype=jnp.float32)

    def make(key, B, N):
        k1, k2 = jax.random.split(key)
        bx = jax.random.uniform(k1, (B, N, _GROUP), jnp.float32, 1.0, 64.0)
        dl = jax.random.normal(k2, (B, N, _GROUP), jnp.float32)
        return bx, dl

    keys = jax.random.split(jax.random.PRNGKey(0), 4)

    # 1) Small shape -> pure-JAX fast path (tiny-input fallback).
    b1, d1 = make(keys[0], 2, 256)
    p1 = jax.block_until_ready(bbox_transform(b1, d1, mean, std))
    r1 = bbox_transform_ref(b1, d1, mean, std)
    assert p1.shape == (2, 256, 5)
    assert jnp.allclose(p1, r1, rtol=1e-5, atol=1e-4)

    # 2) Lane-aligned (B*N % 128 == 0): zero-glue Pallas path, even 4-step grid.
    b2, d2 = make(keys[1], 2, 4096)
    p2 = jax.block_until_ready(bbox_transform(b2, d2, mean, std,
                                              min_pallas_elems=0))
    r2 = bbox_transform_ref(b2, d2, mean, std)
    assert jnp.allclose(p2, r2, rtol=1e-5, atol=1e-4)

    # 3) Lane-aligned but rows not divisible by the tile: uneven last block
    #    (masked boundary stores), still no pad / no output slice.
    b3, d3 = make(keys[2], 2, 4160)
    p3 = jax.block_until_ready(bbox_transform(b3, d3, mean, std,
                                              min_pallas_elems=0))
    r3 = bbox_transform_ref(b3, d3, mean, std)
    assert jnp.allclose(p3, r3, rtol=1e-5, atol=1e-4)

    # 4) Ragged (B*N % 128 != 0): minimal <640-element pad + output slice.
    b4, d4 = make(keys[3], 3, 1530)
    p4 = jax.block_until_ready(bbox_transform(b4, d4, mean, std,
                                              min_pallas_elems=0))
    r4 = bbox_transform_ref(b4, d4, mean, std)
    assert jnp.allclose(p4, r4, rtol=1e-5, atol=1e-4)

    print("KERNEL_OK")
</pallas_src>

<mosaic_0001>
module attributes {stable_mosaic.version = 11 : i64} {
  func.func @_bbox_transform_kernel(%arg0: i32, %arg1: memref<1x640xf32, #tpu.memory_space<vmem>>, %arg2: memref<1x640xf32, #tpu.memory_space<vmem>>, %arg3: memref<1x640xf32, #tpu.memory_space<vmem>>, %arg4: memref<1x640xf32, #tpu.memory_space<vmem>>, %arg5: memref<16x640xf32, #tpu.memory_space<vmem>>, %arg6: memref<16x640xf32, #tpu.memory_space<vmem>>, %arg7: memref<16x640xf32, #tpu.memory_space<vmem>>) attributes {dimension_semantics = [#tpu.dimension_semantics<parallel>], iteration_bounds = array<i64: 4>, scalar_prefetch = 0 : i64, scratch_operands = 0 : i64, tpu.core_type = #tpu.core_type<tc>, window_params = [{pipeline_mode = #tpu.pipeline_mode<synchronous>, transform_indices = @transform_0, window_bounds = array<i64: 1, 640>}, {pipeline_mode = #tpu.pipeline_mode<synchronous>, transform_indices = @transform_1, window_bounds = array<i64: 1, 640>}, {pipeline_mode = #tpu.pipeline_mode<synchronous>, transform_indices = @transform_2, window_bounds = array<i64: 1, 640>}, {pipeline_mode = #tpu.pipeline_mode<synchronous>, transform_indices = @transform_3, window_bounds = array<i64: 1, 640>}, {transform_indices = @transform_4, window_bounds = array<i64: 16, 640>}, {transform_indices = @transform_5, window_bounds = array<i64: 16, 640>}, {transform_indices = @transform_6, window_bounds = array<i64: 16, 640>}]} {
    %c0 = arith.constant 0 : index
    %c0_0 = arith.constant 0 : index
    %0 = vector.load %arg5[%c0, %c0_0] : memref<16x640xf32, #tpu.memory_space<vmem>>, vector<16x640xf32>
    %c0_1 = arith.constant 0 : index
    %c0_2 = arith.constant 0 : index
    %1 = vector.load %arg6[%c0_1, %c0_2] : memref<16x640xf32, #tpu.memory_space<vmem>>, vector<16x640xf32>
    %c0_3 = arith.constant 0 : index
    %c0_4 = arith.constant 0 : index
    %2 = vector.load %arg1[%c0_3, %c0_4] : memref<1x640xf32, #tpu.memory_space<vmem>>, vector<1x640xf32>
    %3 = vector.shape_cast %2 : vector<1x640xf32> to vector<1x640xf32>
    %4 = vector.broadcast %3 : vector<1x640xf32> to vector<16x640xf32>
    %5 = arith.mulf %1, %4 : vector<16x640xf32>
    %c0_5 = arith.constant 0 : index
    %c0_6 = arith.constant 0 : index
    %6 = vector.load %arg2[%c0_5, %c0_6] : memref<1x640xf32, #tpu.memory_space<vmem>>, vector<1x640xf32>
    %7 = vector.shape_cast %6 : vector<1x640xf32> to vector<1x640xf32>
    %8 = vector.broadcast %7 : vector<1x640xf32> to vector<16x640xf32>
    %9 = arith.addf %5, %8 : vector<16x640xf32>
    %c638_i32 = arith.constant 638 : i32
    %10 = tpu.dynamic_rotate %0 by %c638_i32 dim 1 : vector<16x640xf32>, i32 -> vector<16x640xf32>
    %c0_7 = arith.constant 0 : index
    %c0_8 = arith.constant 0 : index
    %11 = vector.load %arg4[%c0_7, %c0_8] : memref<1x640xf32, #tpu.memory_space<vmem>>, vector<1x640xf32>
    %12 = vector.shape_cast %11 : vector<1x640xf32> to vector<1x640xf32>
    %13 = vector.broadcast %12 : vector<1x640xf32> to vector<16x640xf32>
    %cst = arith.constant 0.000000e+00 : f32
    %14 = vector.broadcast %cst : f32 to vector<16x640xf32>
    %15 = arith.cmpf one, %13, %14 : vector<16x640xf32>
    %c0_9 = arith.constant 0 : index
    %c0_10 = arith.constant 0 : index
    %16 = vector.load %arg3[%c0_9, %c0_10] : memref<1x640xf32, #tpu.memory_space<vmem>>, vector<1x640xf32>
    %17 = vector.shape_cast %16 : vector<1x640xf32> to vector<1x640xf32>
    %18 = vector.broadcast %17 : vector<1x640xf32> to vector<16x640xf32>
    %cst_11 = arith.constant 0.000000e+00 : f32
    %19 = vector.broadcast %cst_11 : f32 to vector<16x640xf32>
    %20 = arith.cmpf one, %18, %19 : vector<16x640xf32>
    %cst_12 = arith.constant 1.000000e+00 : f32
    %21 = vector.broadcast %cst_12 : f32 to vector<16x640xf32>
    %22 = arith.select %15, %21, %10 : vector<16x640xi1>, vector<16x640xf32>
    %23 = arith.mulf %9, %22 : vector<16x640xf32>
    %24 = arith.addf %0, %23 : vector<16x640xf32>
    %25 = math.exp2 %9 : vector<16x640xf32>
    %26 = arith.mulf %25, %0 : vector<16x640xf32>
    %27 = arith.select %20, %26, %24 : vector<16x640xi1>, vector<16x640xf32>
    %c0_13 = arith.constant 0 : index
    %c0_14 = arith.constant 0 : index
    %28 = vector.load %arg7[%c0_13, %c0_14] : memref<16x640xf32, #tpu.memory_space<vmem>>, vector<16x640xf32>
    tpu.vector_store %arg7[%c0_13, %c0_14], %27 {strides = array<i32>} : memref<16x640xf32, #tpu.memory_space<vmem>>, vector<16x640xf32>,
    return
  }
  func.func @transform_0(%arg0: i32) -> (i32, i32) {
    %c0_i32 = arith.constant 0 : i32
    %c0_i32_0 = arith.constant 0 : i32
    %c0_i32_1 = arith.constant 0 : i32
    return %c0_i32, %c0_i32_0 : i32, i32
  }
  func.func @transform_1(%arg0: i32) -> (i32, i32) {
    %c0_i32 = arith.constant 0 : i32
    %c0_i32_0 = arith.constant 0 : i32
    %c0_i32_1 = arith.constant 0 : i32
    return %c0_i32, %c0_i32_0 : i32, i32
  }
  func.func @transform_2(%arg0: i32) -> (i32, i32) {
    %c0_i32 = arith.constant 0 : i32
    %c0_i32_0 = arith.constant 0 : i32
    %c0_i32_1 = arith.constant 0 : i32
    return %c0_i32, %c0_i32_0 : i32, i32
  }
  func.func @transform_3(%arg0: i32) -> (i32, i32) {
    %c0_i32 = arith.constant 0 : i32
    %c0_i32_0 = arith.constant 0 : i32
    %c0_i32_1 = arith.constant 0 : i32
    return %c0_i32, %c0_i32_0 : i32, i32
  }
  func.func @transform_4(%arg0: i32) -> (i32, i32) {
    %c0_i32 = arith.constant 0 : i32
    %c0_i32_0 = arith.constant 0 : i32
    return %arg0, %c0_i32 : i32, i32
  }
  func.func @transform_5(%arg0: i32) -> (i32, i32) {
    %c0_i32 = arith.constant 0 : i32
    %c0_i32_0 = arith.constant 0 : i32
    return %arg0, %c0_i32 : i32, i32
  }
  func.func @transform_6(%arg0: i32) -> (i32, i32) {
    %c0_i32 = arith.constant 0 : i32
    %c0_i32_0 = arith.constant 0 : i32
    return %arg0, %c0_i32 : i32, i32
  }
}

</mosaic_0001>

<llo_original>
// kernel: tpu_custom_call.1
$region0: #{tpu_custom_call.1}
  #allocation0 [shape = 'u32[]', space=smem, size = 0x4, offset = 0x4, fixed_abs, tag = 'smem constant byte address 0x4 - core index']
  #allocation1 [shape = 'u32[144,128]{1,0:T(1,128)}', space=vmem, size = 0x12000, scoped, tag = 'internal scratch']
  %s0 = inlined_call_operand.hbm [shape: f32[1,640], index: 0, kind: input, shape index: {}]
  %s1 = inlined_call_operand.hbm [shape: f32[1,640], index: 1, kind: input, shape index: {}]
  %s2 = inlined_call_operand.vmem [shape: f32[1,640], index: 2, kind: input, shape index: {}]
  %s3 = inlined_call_operand.vmem [shape: f32[1,640], index: 3, kind: input, shape index: {}]
  %s4 = inlined_call_operand.hbm [shape: f32[64,640], index: 4, kind: input, shape index: {}]
  %s5 = inlined_call_operand.hbm [shape: f32[64,640], index: 5, kind: input, shape index: {}]
  %s6 = inlined_call_operand.hbm [shape: f32[64,640], index: 6, kind: output, shape index: {}]
  %s7 = sld [smem:[#allocation0]]
  $region73: #{tpu_custom_call.1} parent=0
    _
  %s9 = ssub.s32 1, %s7
  %s10 = scalar_select 0, %s9, %s7
  $region1: #{tpu_custom_call.1} parent=0
    #allocation2 [shape = 'u8[2560]{0}', space=vmem, size = 0xc00, scoped, tag = 'input window, operand 0, single buffered']
    #allocation3 [shape = 's32[2]{0}', space=sflag, size = 0x8, scoped, tag = 'scoped memory for tpu_custom_call.1']
    #allocation4 [shape = 's32[2]{0}', space=sflag, size = 0x8, scoped, tag = 'scoped memory for tpu_custom_call.1']
    #allocation5 [shape = 'u8[2560]{0}', space=vmem, size = 0xc00, scoped, tag = 'input window, operand 1, single buffered']
    #allocation6 [shape = 's32[1]{0}', space=sflag, size = 0x4, scoped, tag = 'scoped memory for tpu_custom_call.1']
    #allocation7 [shape = 'u8[81920]{0}', space=vmem, size = 0x14000, scoped, tag = 'input window, operand 4']
    #allocation8 [shape = 'u8[81920]{0}', space=vmem, size = 0x14000, scoped, tag = 'input window, operand 5']
    #allocation9 [shape = 'u8[81920]{0}', space=vmem, size = 0x14000, scoped, tag = 'output window, operand 0']
    %11 = vsyncpa [#allocation3], 0
    %12 = vsyncpa [#allocation6], 0
    %13 = vsyncpa [#allocation4], 0
    %s14 = scalar_lea.sflag [#allocation4], 1
    %15 = vsyncpa %s14, 0
    loop: start=0, step=1, limit=6
    $region2: #{tpu_custom_call.1} parent=1 // loop_pre_header
      _
    $region3: #{tpu_custom_call.1} parent=1 // loop_header
      %s17 = sphi 0, %s21
      %p18 = scmp.ge.s32.totalorder %s17, 6
      %s25 = sphi 0, %s25
      %s27 = sphi 0, %s25
      %s28 = sphi 0, %s27
      %s42 = sphi 0, %s28
      %s46 = sphi 0, %s46
      %s48 = sphi 0, %s46
      %s49 = sphi 0, %s48
      %s63 = sphi 0, %s49
      %s67 = sphi 0, %s67
      %s69 = sphi 0, %s67
      %s70 = sphi 0, %s69
      %s84 = sphi 0, %s70
      %s88 = sphi 0, %s88
      %s90 = sphi 0, %s88
      %s91 = sphi 0, %s90
      %s105 = sphi 0, %s91
      %s111 = sphi 0, %s113
      %s114 = sphi 0, %s111
      %s115 = sphi 0, %s114
      %s131 = sphi 0, %s115
      %s137 = sphi 0, %s139
      %s140 = sphi 0, %s137
      %s141 = sphi 0, %s140
      %s157 = sphi 0, %s141
      %s163 = sphi 0, %s165
      %s166 = sphi 0, %s163
      %s167 = sphi 0, %s166
      %s183 = sphi 0, %s167
    $region4: #{tpu_custom_call.1} parent=1 // loop_header_branch
      %20 = sbr.rel (%p18) target = $region8
    $region5: #{tpu_custom_call.1} parent=1 // loop_body
      %s22 = ssub.s32 %s17, 1
      %s23 = ssub.s32 %s17, 2
      %s24 = sadd.s32 %s17, 1
      %s26 = sadd.s32 %s25, 1
      %p29 = scmp.eq.s32.totalorder %s17, 3
      %p30 = scmp.ne.s32.totalorder %s25, %s27
      %p31 = scmp.eq.s32.totalorder %s17, 0
      %p32 = por %p30, %p31
      %p33 = scmp.ne.s32.totalorder %s25, %s27
      %p34 = scmp.eq.s32.totalorder %s22, 3
      %p35 = por %p33, %p34
      %p36 = scmp.ne.s32.totalorder %s27, %s28
      %p37 = scmp.eq.s32.totalorder %s22, 0
      %p38 = por %p36, %p37
      %p39 = scmp.ne.s32.totalorder %s27, %s28
      %p40 = scmp.eq.s32.totalorder %s23, 3
      %p41 = por %p39, %p40
      %p43 = scmp.ne.s32.totalorder %s28, %s42
      %p44 = scmp.eq.s32.totalorder %s23, 0
      %p45 = por %p43, %p44
      %s47 = sadd.s32 %s46, 1
      %p50 = scmp.eq.s32.totalorder %s17, 3
      %p51 = scmp.ne.s32.totalorder %s46, %s48
      %p52 = scmp.eq.s32.totalorder %s17, 0
      %p53 = por %p51, %p52
      %p54 = scmp.ne.s32.totalorder %s46, %s48
      %p55 = scmp.eq.s32.totalorder %s22, 3
      %p56 = por %p54, %p55
      %p57 = scmp.ne.s32.totalorder %s48, %s49
      %p58 = scmp.eq.s32.totalorder %s22, 0
      %p59 = por %p57, %p58
      %p60 = scmp.ne.s32.totalorder %s48, %s49
      %p61 = scmp.eq.s32.totalorder %s23, 3
      %p62 = por %p60, %p61
      %p64 = scmp.ne.s32.totalorder %s49, %s63
      %p65 = scmp.eq.s32.totalorder %s23, 0
      %p66 = por %p64, %p65
      %s68 = sadd.s32 %s67, 1
      %p71 = scmp.eq.s32.totalorder %s17, 3
      %p72 = scmp.ne.s32.totalorder %s67, %s69
      %p73 = scmp.eq.s32.totalorder %s17, 0
      %p74 = por %p72, %p73
      %p75 = scmp.ne.s32.totalorder %s67, %s69
      %p76 = scmp.eq.s32.totalorder %s22, 3
      %p77 = por %p75, %p76
      %p78 = scmp.ne.s32.totalorder %s69, %s70
      %p79 = scmp.eq.s32.totalorder %s22, 0
      %p80 = por %p78, %p79
      %p81 = scmp.ne.s32.totalorder %s69, %s70
      %p82 = scmp.eq.s32.totalorder %s23, 3
      %p83 = por %p81, %p82
      %p85 = scmp.ne.s32.totalorder %s70, %s84
      %p86 = scmp.eq.s32.totalorder %s23, 0
      %p87 = por %p85, %p86
      %s89 = sadd.s32 %s88, 1
      %p92 = scmp.eq.s32.totalorder %s17, 3
      %p93 = scmp.ne.s32.totalorder %s88, %s90
      %p94 = scmp.eq.s32.totalorder %s17, 0
      %p95 = por %p93, %p94
      %p96 = scmp.ne.s32.totalorder %s88, %s90
      %p97 = scmp.eq.s32.totalorder %s22, 3
      %p98 = por %p96, %p97
      %p99 = scmp.ne.s32.totalorder %s90, %s91
      %p100 = scmp.eq.s32.totalorder %s22, 0
      %p101 = por %p99, %p100
      %p102 = scmp.ne.s32.totalorder %s90, %s91
      %p103 = scmp.eq.s32.totalorder %s23, 3
      %p104 = por %p102, %p103
      %p106 = scmp.ne.s32.totalorder %s91, %s105
      %p107 = scmp.eq.s32.totalorder %s23, 0
      %p108 = por %p106, %p107
      %s109 = ssub.s32 %s17, %s24
      %p110 = scmp.eq.s32.totalorder %s109, 0
      %s112 = sadd.s32 %s111, 1
      %s113 = scalar_select %p110, %s111, %s112
      %p116 = pneg %p110
      %p117 = scmp.eq.s32.totalorder %s17, 3
      %p118 = por %p116, %p117
      %p119 = scmp.ne.s32.totalorder %s111, %s114
      %p120 = scmp.eq.s32.totalorder %s17, 0
      %p121 = por %p119, %p120
      %p122 = scmp.ne.s32.totalorder %s111, %s114
      %p123 = scmp.eq.s32.totalorder %s22, 3
      %p124 = por %p122, %p123
      %p125 = scmp.ne.s32.totalorder %s114, %s115
      %p126 = scmp.eq.s32.totalorder %s22, 0
      %p127 = por %p125, %p126
      %p128 = scmp.ne.s32.totalorder %s114, %s115
      %p129 = scmp.eq.s32.totalorder %s23, 3
      %p130 = por %p128, %p129
      %p132 = scmp.ne.s32.totalorder %s115, %s131
      %p133 = scmp.eq.s32.totalorder %s23, 0
      %p134 = por %p132, %p133
      %s135 = ssub.s32 %s17, %s24
      %p136 = scmp.eq.s32.totalorder %s135, 0
      %s138 = sadd.s32 %s137, 1
      %s139 = scalar_select %p136, %s137, %s138
      %p142 = pneg %p136
      %p143 = scmp.eq.s32.totalorder %s17, 3
      %p144 = por %p142, %p143
      %p145 = scmp.ne.s32.totalorder %s137, %s140
      %p146 = scmp.eq.s32.totalorder %s17, 0
      %p147 = por %p145, %p146
      %p148 = scmp.ne.s32.totalorder %s137, %s140
      %p149 = scmp.eq.s32.totalorder %s22, 3
      %p150 = por %p148, %p149
      %p151 = scmp.ne.s32.totalorder %s140, %s141
      %p152 = scmp.eq.s32.totalorder %s22, 0
      %p153 = por %p151, %p152
      %p154 = scmp.ne.s32.totalorder %s140, %s141
      %p155 = scmp.eq.s32.totalorder %s23, 3
      %p156 = por %p154, %p155
      %p158 = scmp.ne.s32.totalorder %s141, %s157
      %p159 = scmp.eq.s32.totalorder %s23, 0
      %p160 = por %p158, %p159
      %s161 = ssub.s32 %s17, %s24
      %p162 = scmp.eq.s32.totalorder %s161, 0
      %s164 = sadd.s32 %s163, 1
      %s165 = scalar_select %p162, %s163, %s164
      %p168 = pneg %p162
      %p169 = scmp.eq.s32.totalorder %s17, 3
      %p170 = por %p168, %p169
      %p171 = scmp.ne.s32.totalorder %s163, %s166
      %p172 = scmp.eq.s32.totalorder %s17, 0
      %p173 = por %p171, %p172
      %p174 = scmp.ne.s32.totalorder %s163, %s166
      %p175 = scmp.eq.s32.totalorder %s22, 3
      %p176 = por %p174, %p175
      %p177 = scmp.ne.s32.totalorder %s166, %s167
      %p178 = scmp.eq.s32.totalorder %s22, 0
      %p179 = por %p177, %p178
      %p180 = scmp.ne.s32.totalorder %s166, %s167
      %p181 = scmp.eq.s32.totalorder %s23, 3
      %p182 = por %p180, %p181
      %p184 = scmp.ne.s32.totalorder %s167, %s183
      %p185 = scmp.eq.s32.totalorder %s23, 0
      %p186 = por %p184, %p185
      %p187 = scmp.le.s32.totalorder 1, %s17
      %p188 = scmp.lt.s32.totalorder %s17, 5
      %p189 = pnand %p187, %p188
      %p190 = pneg %p189
      // Predicated region
      $region9: #{tpu_custom_call.1} parent=5 // pred_check
        _
      $region10: #{tpu_custom_call.1} parent=5 // pred_check_branch
        %192 = sbr.rel (%p189) target = $region12
      $region11: #{tpu_custom_call.1} parent=5 // pred_region
        %s193 = ssub.s32 %s17, 1
        // Predicated region
        $region13: #{tpu_custom_call.1} parent=11 // pred_check
          %p194 = pneg %p38
        $region14: #{tpu_custom_call.1} parent=11 // pred_check_branch
          %196 = sbr.rel (%p194) target = $region16
        $region15: #{tpu_custom_call.1} parent=11 // pred_region
          %s198 = ssub.s32 80, 80
          %199 = vsyncadd [#allocation3], %s198
          %s201 = sshll.u32 [#allocation2], 4
          %s202 = int_to_ptr.vmem [resolvable:$true] %s201
          %204 = dma.hbm_to_vmem [thread:$0]  %s0, 80, %s202, [#allocation3]
        $region16: #{tpu_custom_call.1} parent=11 // pred_fallthru
          _
        // Predicated region
        $region17: #{tpu_custom_call.1} parent=11 // pred_check
          %p205 = pneg %p59
        $region18: #{tpu_custom_call.1} parent=11 // pred_check_branch
          %207 = sbr.rel (%p205) target = $region20
        $region19: #{tpu_custom_call.1} parent=11 // pred_region
          %s209 = ssub.s32 80, 80
          %210 = vsyncadd [#allocation6], %s209
          %s212 = sshll.u32 [#allocation5], 4
          %s213 = int_to_ptr.vmem [resolvable:$true] %s212
          %215 = dma.hbm_to_vmem [thread:$0]  %s1, 80, %s213, [#allocation6]
        $region20: #{tpu_custom_call.1} parent=11 // pred_fallthru
          _
        // Predicated region
        $region21: #{tpu_custom_call.1} parent=11 // pred_check
          %p216 = pneg %p80
        $region22: #{tpu_custom_call.1} parent=11 // pred_check_branch
          %218 = sbr.rel (%p216) target = $region24
        $region23: #{tpu_custom_call.1} parent=11 // pred_region
          _
        $region24: #{tpu_custom_call.1} parent=11 // pred_fallthru
          _
        // Predicated region
        $region25: #{tpu_custom_call.1} parent=11 // pred_check
          %p219 = pneg %p101
        $region26: #{tpu_custom_call.1} parent=11 // pred_check_branch
          %221 = sbr.rel (%p219) target = $region28
        $region27: #{tpu_custom_call.1} parent=11 // pred_region
          _
        $region28: #{tpu_custom_call.1} parent=11 // pred_fallthru
          _
      $region12: #{tpu_custom_call.1} parent=5 // pred_fallthru
        _
      %p222 = scmp.lt.s32.totalorder %s17, 4
      // Predicated region
      $region29: #{tpu_custom_call.1} parent=5 // pred_check
        %p223 = pneg %p222
      $region30: #{tpu_custom_call.1} parent=5 // pred_check_branch
        %225 = sbr.rel (%p223) target = $region32
      $region31: #{tpu_custom_call.1} parent=5 // pred_region
        // Predicated region
        $region33: #{tpu_custom_call.1} parent=31 // pred_check
          %p226 = pneg %p121
        $region34: #{tpu_custom_call.1} parent=31 // pred_check_branch
          %228 = sbr.rel (%p226) target = $region36
        $region35: #{tpu_custom_call.1} parent=31 // pred_region
          %s229 = sand.u32 %s17, 1
          %s230 = scalar_lea.sflag [#allocation3], %s229
          %s231 = sand.u32 %s111, 1
          %s232 = smul.addr %s231, 80
          %s233 = scalar_lea.vmem [#allocation7], %s232
          %s234 = smul.u32 2, %s17
          %s236 = ssub.s32 1280, 1280
          %237 = vsyncadd %s230, %s236
          %s238 = smul.addr %s234, 5
          %s239 = smul.addr %s238, 128
          %s240 = scalar_lea.hbm %s4, %s239
          %s241 = sshll.u32 %s233, 4
          %s242 = int_to_ptr.vmem [resolvable:$true] %s241
          %247 = dma.hbm_to_vmem [thread:$0]  %s240, 1280, %s242, %s230, 640, 640, 40
        $region36: #{tpu_custom_call.1} parent=31 // pred_fallthru
          _
        // Predicated region
        $region37: #{tpu_custom_call.1} parent=31 // pred_check
          %p248 = pneg %p147
        $region38: #{tpu_custom_call.1} parent=31 // pred_check_branch
          %250 = sbr.rel (%p248) target = $region40
        $region39: #{tpu_custom_call.1} parent=31 // pred_region
          %s251 = sand.u32 %s17, 1
          %s252 = scalar_lea.sflag [#allocation3], %s251
          %s253 = sand.u32 %s137, 1
          %s254 = smul.addr %s253, 80
          %s255 = scalar_lea.vmem [#allocation8], %s254
          %s256 = smul.u32 2, %s17
          %s258 = ssub.s32 1280, 1280
          %259 = vsyncadd %s252, %s258
          %s260 = smul.addr %s256, 5
          %s261 = smul.addr %s260, 128
          %s262 = scalar_lea.hbm %s5, %s261
          %s263 = sshll.u32 %s255, 4
          %s264 = int_to_ptr.vmem [resolvable:$true] %s263
          %269 = dma.hbm_to_vmem [thread:$0]  %s262, 1280, %s264, %s252, 640, 640, 40
        $region40: #{tpu_custom_call.1} parent=31 // pred_fallthru
          _
      $region32: #{tpu_custom_call.1} parent=5 // pred_fallthru
        _
      %p270 = scmp.le.s32.totalorder 1, %s17
      %p271 = scmp.lt.s32.totalorder %s17, 5
      %p272 = pnand %p270, %p271
      %p273 = pneg %p272
      // Predicated region
      $region41: #{tpu_custom_call.1} parent=5 // pred_check
        _
      $region42: #{tpu_custom_call.1} parent=5 // pred_check_branch
        %275 = sbr.rel (%p272) target = $region44
      $region43: #{tpu_custom_call.1} parent=5 // pred_region
        %s276 = ssub.s32 %s17, 1
        // Predicated region
        $region45: #{tpu_custom_call.1} parent=43 // pred_check
          %p277 = pneg %p38
        $region46: #{tpu_custom_call.1} parent=43 // pred_check_branch
          %279 = sbr.rel (%p277) target = $region48
        $region47: #{tpu_custom_call.1} parent=43 // pred_region
          %280 = dma.done [#allocation3], 80
        $region48: #{tpu_custom_call.1} parent=43 // pred_fallthru
          _
        // Predicated region
        $region49: #{tpu_custom_call.1} parent=43 // pred_check
          %p281 = pneg %p59
        $region50: #{tpu_custom_call.1} parent=43 // pred_check_branch
          %283 = sbr.rel (%p281) target = $region52
        $region51: #{tpu_custom_call.1} parent=43 // pred_region
          %284 = dma.done [#allocation6], 80
        $region52: #{tpu_custom_call.1} parent=43 // pred_fallthru
          _
        %s285 = sand.u32 %s22, 1
        %s286 = scalar_lea.sflag [#allocation3], %s285
        %s287 = sand.u32 %s114, 1
        %s288 = smul.addr %s287, 80
        %s289 = scalar_lea.vmem [#allocation7], %s288
        // Predicated region
        $region53: #{tpu_custom_call.1} parent=43 // pred_check
          %p290 = pneg %p127
        $region54: #{tpu_custom_call.1} parent=43 // pred_check_branch
          %292 = sbr.rel (%p290) target = $region56
        $region55: #{tpu_custom_call.1} parent=43 // pred_region
          %293 = dma.done %s286, 1280
        $region56: #{tpu_custom_call.1} parent=43 // pred_fallthru
          _
        %s294 = sand.u32 %s22, 1
        %s295 = scalar_lea.sflag [#allocation3], %s294
        %s296 = sand.u32 %s140, 1
        %s297 = smul.addr %s296, 80
        %s298 = scalar_lea.vmem [#allocation8], %s297
        // Predicated region
        $region57: #{tpu_custom_call.1} parent=43 // pred_check
          %p299 = pneg %p153
        $region58: #{tpu_custom_call.1} parent=43 // pred_check_branch
          %301 = sbr.rel (%p299) target = $region60
        $region59: #{tpu_custom_call.1} parent=43 // pred_region
          %302 = dma.done %s295, 1280
        $region60: #{tpu_custom_call.1} parent=43 // pred_fallthru
          _
        %p303 = pneg %p38
        %p304 = pneg %p35
        %p305 = pneg %p59
        %p306 = pneg %p56
        %p307 = pneg %p80
        %p308 = pneg %p77
        %p309 = pneg %p101
        %p310 = pneg %p98
        %s311 = sand.u32 %s22, 1
        %s312 = scalar_lea.sflag [#allocation3], %s311
        %s313 = sand.u32 %s114, 1
        %s314 = smul.addr %s313, 80
        %s315 = scalar_lea.vmem [#allocation7], %s314
        %p316 = pneg %p127
        %p317 = pneg %p124
        %s318 = sand.u32 %s22, 1
        %s319 = scalar_lea.sflag [#allocation3], %s318
        %s320 = sand.u32 %s140, 1
        %s321 = smul.addr %s320, 80
        %s322 = scalar_lea.vmem [#allocation8], %s321
        %p323 = pneg %p153
        %p324 = pneg %p150
        %p325 = pneg %p179
        %p326 = pneg %p176
        %s327 = sand.u32 %s166, 1
        %s328 = scalar_lea.sflag [#allocation4], %s327
        %s329 = sand.u32 %s166, 1
        %s330 = smul.addr %s329, 80
        %s331 = scalar_lea.vmem [#allocation9], %s330
        %s332 = smul.u32 2, %s22
        %s333 = smul.u32 2, %s22
        %s334 = smul.u32 2, %s22
        %v335 = vld [vmem:[%s289] sm:$0xff]
        %v336 = vld [vmem:[%s289 + $0x8] sm:$0xff]
        %v337 = vld [vmem:[%s289 + $0x10] sm:$0xff]
        %v338 = vld [vmem:[%s289 + $0x18] sm:$0xff]
        %v339 = vld [vmem:[%s289 + $0x20] sm:$0xff]
        %v340 = vld [vmem:[%s289 + $0x28] sm:$0xff]
        %v341 = vld [vmem:[%s289 + $0x30] sm:$0xff]
        %v342 = vld [vmem:[%s289 + $0x38] sm:$0xff]
        %v343 = vld [vmem:[%s289 + $0x40] sm:$0xff]
        %v344 = vld [vmem:[%s289 + $0x48] sm:$0xff]
        %v345 = vld [vmem:[%s298] sm:$0xff]
        %v346 = vld [vmem:[%s298 + $0x8] sm:$0xff]
        %v347 = vld [vmem:[%s298 + $0x10] sm:$0xff]
        %v348 = vld [vmem:[%s298 + $0x18] sm:$0xff]
        %v349 = vld [vmem:[%s298 + $0x20] sm:$0xff]
        %v350 = vld [vmem:[%s298 + $0x28] sm:$0xff]
        %v351 = vld [vmem:[%s298 + $0x30] sm:$0xff]
        %v352 = vld [vmem:[%s298 + $0x38] sm:$0xff]
        %v353 = vld [vmem:[%s298 + $0x40] sm:$0xff]
        %v354 = vld [vmem:[%s298 + $0x48] sm:$0xff]
        %v355 = vld [vmem:[#allocation2] sm:$0x1f]
        %v357 = vlaneseq
        %v358 = vshrl.u32 %v357, 7
        %v359 = vsub.s32 0, %v358
        %v360 = vrot.slane %v355, %v359
        %v361 = vlaneseq
        %v362 = vshrl.u32 %v361, 7
        %v363 = vsub.s32 1, %v362
        %v364 = vrot.slane %v355, %v363
        %v365 = vlaneseq
        %v366 = vshrl.u32 %v365, 7
        %v367 = vsub.s32 2, %v366
        %v368 = vrot.slane %v355, %v367
        %v369 = vlaneseq
        %v370 = vshrl.u32 %v369, 7
        %v371 = vsub.s32 3, %v370
        %v372 = vrot.slane %v355, %v371
        %v373 = vlaneseq
        %v374 = vshrl.u32 %v373, 7
        %v375 = vsub.s32 4, %v374
        %v376 = vrot.slane %v355, %v375
        %v382 = vmul.f32 %v345, %v360
        %v383 = vmul.f32 %v346, %v364
        %v384 = vmul.f32 %v347, %v368
        %v385 = vmul.f32 %v348, %v372
        %v386 = vmul.f32 %v349, %v376
        %v387 = vmul.f32 %v350, %v360
        %v388 = vmul.f32 %v351, %v364
        %v389 = vmul.f32 %v352, %v368
        %v390 = vmul.f32 %v353, %v372
        %v391 = vmul.f32 %v354, %v376
        %v392 = vld [vmem:[#allocation5] sm:$0x1f]
        %v394 = vlaneseq
        %v395 = vshrl.u32 %v394, 7
        %v396 = vsub.s32 0, %v395
        %v397 = vrot.slane %v392, %v396
        %v398 = vlaneseq
        %v399 = vshrl.u32 %v398, 7
        %v400 = vsub.s32 1, %v399
        %v401 = vrot.slane %v392, %v400
        %v402 = vlaneseq
        %v403 = vshrl.u32 %v402, 7
        %v404 = vsub.s32 2, %v403
        %v405 = vrot.slane %v392, %v404
        %v406 = vlaneseq
        %v407 = vshrl.u32 %v406, 7
        %v408 = vsub.s32 3, %v407
        %v409 = vrot.slane %v392, %v408
        %v410 = vlaneseq
        %v411 = vshrl.u32 %v410, 7
        %v412 = vsub.s32 4, %v411
        %v413 = vrot.slane %v392, %v412
        %v419 = vadd.f32 %v382, %v397
        %v420 = vadd.f32 %v383, %v401
        %v421 = vadd.f32 %v384, %v405
        %v422 = vadd.f32 %v385, %v409
        %v423 = vadd.f32 %v386, %v413
        %v424 = vadd.f32 %v387, %v397
        %v425 = vadd.f32 %v388, %v401
        %v426 = vadd.f32 %v389, %v405
        %v427 = vadd.f32 %v390, %v409
        %v428 = vadd.f32 %v391, %v413
        %429 = vrot.lane.b32.xlu0 %v335, 126
        %v430 = vpop.permute.xlu0 %429
        %431 = vrot.lane.b32.xlu0 %v340, 126
        %v432 = vpop.permute.xlu0 %431
        %433 = vrot.lane.b32.xlu0 %v336, 126
        %v434 = vpop.permute.xlu0 %433
        %435 = vrot.lane.b32.xlu0 %v341, 126
        %v436 = vpop.permute.xlu0 %435
        %437 = vrot.lane.b32.xlu0 %v337, 126
        %v438 = vpop.permute.xlu0 %437
        %439 = vrot.lane.b32.xlu0 %v342, 126
        %v440 = vpop.permute.xlu0 %439
        %441 = vrot.lane.b32.xlu0 %v338, 126
        %v442 = vpop.permute.xlu0 %441
        %443 = vrot.lane.b32.xlu0 %v343, 126
        %v444 = vpop.permute.xlu0 %443
        %445 = vrot.lane.b32.xlu0 %v339, 126
        %v446 = vpop.permute.xlu0 %445
        %447 = vrot.lane.b32.xlu0 %v344, 126
        %v448 = vpop.permute.xlu0 %447
        %v449 = vlaneseq
        %v450 = vand.u32 %v449, 127
        %vm451 = vcmp.lt.s32.totalorder %v450, 126
        %v452 = vsel %vm451, %v442, %v446
        %v453 = vsel %vm451, %v444, %v448
        %v454 = vsel %vm451, %v438, %v442
        %v455 = vsel %vm451, %v440, %v444
        %v456 = vsel %vm451, %v434, %v438
        %v457 = vsel %vm451, %v436, %v440
        %v458 = vsel %vm451, %v430, %v434
        %v459 = vsel %vm451, %v432, %v436
        %v460 = vsel %vm451, %v446, %v430
        %v461 = vsel %vm451, %v448, %v432
        %v462 = vld [vmem:[%s3] sm:$0x1f]
        %v464 = vlaneseq
        %v465 = vshrl.u32 %v464, 7
        %v466 = vsub.s32 0, %v465
        %v467 = vrot.slane %v462, %v466
        %v468 = vlaneseq
        %v469 = vshrl.u32 %v468, 7
        %v470 = vsub.s32 1, %v469
        %v471 = vrot.slane %v462, %v470
        %v472 = vlaneseq
        %v473 = vshrl.u32 %v472, 7
        %v474 = vsub.s32 2, %v473
        %v475 = vrot.slane %v462, %v474
        %v476 = vlaneseq
        %v477 = vshrl.u32 %v476, 7
        %v478 = vsub.s32 3, %v477
        %v479 = vrot.slane %v462, %v478
        %v480 = vlaneseq
        %v481 = vshrl.u32 %v480, 7
        %v482 = vsub.s32 4, %v481
        %v483 = vrot.slane %v462, %v482
        %vm489 = vcmp.ne.f32.partialorder %v467, 0.0
        %vm490 = vcmp.ne.f32.partialorder %v471, 0.0
        %vm491 = vcmp.ne.f32.partialorder %v475, 0.0
        %vm492 = vcmp.ne.f32.partialorder %v479, 0.0
        %vm493 = vcmp.ne.f32.partialorder %v483, 0.0
        %v494 = vld [vmem:[%s2] sm:$0x1f]
        %v496 = vlaneseq
        %v497 = vshrl.u32 %v496, 7
        %v498 = vsub.s32 0, %v497
        %v499 = vrot.slane %v494, %v498
        %v500 = vlaneseq
        %v501 = vshrl.u32 %v500, 7
        %v502 = vsub.s32 1, %v501
        %v503 = vrot.slane %v494, %v502
        %v504 = vlaneseq
        %v505 = vshrl.u32 %v504, 7
        %v506 = vsub.s32 2, %v505
        %v507 = vrot.slane %v494, %v506
        %v508 = vlaneseq
        %v509 = vshrl.u32 %v508, 7
        %v510 = vsub.s32 3, %v509
        %v511 = vrot.slane %v494, %v510
        %v512 = vlaneseq
        %v513 = vshrl.u32 %v512, 7
        %v514 = vsub.s32 4, %v513
        %v515 = vrot.slane %v494, %v514
        %vm521 = vcmp.ne.f32.partialorder %v499, 0.0
        %vm522 = vcmp.ne.f32.partialorder %v503, 0.0
        %vm523 = vcmp.ne.f32.partialorder %v507, 0.0
        %vm524 = vcmp.ne.f32.partialorder %v511, 0.0
        %vm525 = vcmp.ne.f32.partialorder %v515, 0.0
        %v526 = vsel %vm489, 1.0, %v458
        %v527 = vsel %vm490, 1.0, %v456
        %v528 = vsel %vm491, 1.0, %v454
        %v529 = vsel %vm492, 1.0, %v452
        %v530 = vsel %vm493, 1.0, %v460
        %v531 = vsel %vm489, 1.0, %v459
        %v532 = vsel %vm490, 1.0, %v457
        %v533 = vsel %vm491, 1.0, %v455
        %v534 = vsel %vm492, 1.0, %v453
        %v535 = vsel %vm493, 1.0, %v461
        %v536 = vmul.f32 %v419, %v526
        %v537 = vmul.f32 %v420, %v527
        %v538 = vmul.f32 %v421, %v528
        %v539 = vmul.f32 %v422, %v529
        %v540 = vmul.f32 %v423, %v530
        %v541 = vmul.f32 %v424, %v531
        %v542 = vmul.f32 %v425, %v532
        %v543 = vmul.f32 %v426, %v533
        %v544 = vmul.f32 %v427, %v534
        %v545 = vmul.f32 %v428, %v535
        %v546 = vadd.f32 %v335, %v536
        %v547 = vadd.f32 %v336, %v537
        %v548 = vadd.f32 %v337, %v538
        %v549 = vadd.f32 %v338, %v539
        %v550 = vadd.f32 %v339, %v540
        %v551 = vadd.f32 %v340, %v541
        %v552 = vadd.f32 %v341, %v542
        %v553 = vadd.f32 %v342, %v543
        %v554 = vadd.f32 %v343, %v544
        %v555 = vadd.f32 %v344, %v545
        %v556 = vpow.pop %v419
        %v557 = vpow.pop %v420
        %v558 = vpow.pop %v421
        %v559 = vpow.pop %v422
        %v560 = vpow.pop %v423
        %v561 = vpow.pop %v424
        %v562 = vpow.pop %v425
        %v563 = vpow.pop %v426
        %v564 = vpow.pop %v427
        %v565 = vpow.pop %v428
        %v566 = vmul.f32 %v556, %v335
        %v567 = vmul.f32 %v557, %v336
        %v568 = vmul.f32 %v558, %v337
        %v569 = vmul.f32 %v559, %v338
        %v570 = vmul.f32 %v560, %v339
        %v571 = vmul.f32 %v561, %v340
        %v572 = vmul.f32 %v562, %v341
        %v573 = vmul.f32 %v563, %v342
        %v574 = vmul.f32 %v564, %v343
        %v575 = vmul.f32 %v565, %v344
        %v576 = vsel %vm521, %v566, %v546
        %v577 = vsel %vm522, %v567, %v547
        %v578 = vsel %vm523, %v568, %v548
        %v579 = vsel %vm524, %v569, %v549
        %v580 = vsel %vm525, %v570, %v550
        %v581 = vsel %vm521, %v571, %v551
        %v582 = vsel %vm522, %v572, %v552
        %v583 = vsel %vm523, %v573, %v553
        %v584 = vsel %vm524, %v574, %v554
        %v585 = vsel %vm525, %v575, %v555
        %586 = vst [vmem:[%s331] sm:$0xff] %v576
        %587 = vst [vmem:[%s331 + $0x8] sm:$0xff] %v577
        %588 = vst [vmem:[%s331 + $0x10] sm:$0xff] %v578
        %589 = vst [vmem:[%s331 + $0x18] sm:$0xff] %v579
        %590 = vst [vmem:[%s331 + $0x20] sm:$0xff] %v580
        %591 = vst [vmem:[%s331 + $0x28] sm:$0xff] %v581
        %592 = vst [vmem:[%s331 + $0x30] sm:$0xff] %v582
        %593 = vst [vmem:[%s331 + $0x38] sm:$0xff] %v583
        %594 = vst [vmem:[%s331 + $0x40] sm:$0xff] %v584
        %595 = vst [vmem:[%s331 + $0x48] sm:$0xff] %v585
        %s596 = sand.u32 %s166, 1
        %s597 = scalar_lea.sflag [#allocation4], %s596
        %s598 = sand.u32 %s166, 1
        %s599 = smul.addr %s598, 80
        %s600 = scalar_lea.vmem [#allocation9], %s599
        // Predicated region
        $region61: #{tpu_custom_call.1} parent=43 // pred_check
          %p601 = pneg %p176
        $region62: #{tpu_custom_call.1} parent=43 // pred_check_branch
          %603 = sbr.rel (%p601) target = $region64
        $region63: #{tpu_custom_call.1} parent=43 // pred_region
          %s604 = smul.u32 2, %s22
          %s606 = ssub.s32 1280, 1280
          %607 = vsyncadd %s597, %s606
          %s608 = smul.addr %s604, 5
          %s609 = smul.addr %s608, 128
          %s610 = scalar_lea.hbm %s6, %s609
          %s611 = sshll.u32 %s600, 4
          %s612 = int_to_ptr.vmem [resolvable:$true] %s611
          %617 = dma.vmem_to_hbm [thread:$0]  %s612, 1280, %s610, %s597, 640, 640, 40
        $region64: #{tpu_custom_call.1} parent=43 // pred_fallthru
          _
      $region44: #{tpu_custom_call.1} parent=5 // pred_fallthru
        _
      %p618 = scmp.le.s32.totalorder 2, %s17
      // Predicated region
      $region65: #{tpu_custom_call.1} parent=5 // pred_check
        %p619 = pneg %p618
      $region66: #{tpu_custom_call.1} parent=5 // pred_check_branch
        %621 = sbr.rel (%p619) target = $region68
      $region67: #{tpu_custom_call.1} parent=5 // pred_region
        %s622 = ssub.s32 %s17, 2
        // Predicated region
        $region69: #{tpu_custom_call.1} parent=67 // pred_check
          %p623 = pneg %p182
        $region70: #{tpu_custom_call.1} parent=67 // pred_check_branch
          %625 = sbr.rel (%p623) target = $region72
        $region71: #{tpu_custom_call.1} parent=67 // pred_region
          %s626 = sand.u32 %s167, 1
          %s627 = scalar_lea.sflag [#allocation4], %s626
          %s628 = sand.u32 %s167, 1
          %s629 = smul.addr %s628, 80
          %s630 = scalar_lea.vmem [#allocation9], %s629
          %631 = dma.done %s627, 1280
        $region72: #{tpu_custom_call.1} parent=67 // pred_fallthru
          _
      $region68: #{tpu_custom_call.1} parent=5 // pred_fallthru
        _
    $region6: #{tpu_custom_call.1} parent=1 // loop_footer
      %s21 = sadd.s32 1, %s17
    $region7: #{tpu_custom_call.1} parent=1 // loop_footer_branch
      %16 = sbr.rel target = $region3
    $region8: #{tpu_custom_call.1} parent=1 // loop_exit
      _
    %632 = vsyncpa [#allocation3], 1
    %s633 = scalar_lea.sflag [#allocation3], 1
    %634 = vsyncpa %s633, 1
    %635 = vsyncpa [#allocation6], 1
    %636 = vsyncpa [#allocation4], 1
    %s637 = scalar_lea.sflag [#allocation4], 1
    %638 = vsyncpa %s637, 1

</llo_original>
